<compile_context>
chip_gen: v5e
topology: v5e:2x2
jax: 0.10.0
libtpu: 0.0.40
codegen_flags: <defaults>
</compile_context>

<pallas_src>
import jax
import jax.numpy as jnp
import numpy as np
from jax.experimental import pallas as pl
from jax.experimental.pallas import tpu as pltpu


# ------------------------------- Pallas kernel -------------------------------

def _pooler_kernel(x_ref, w_ref, b_ref, o_ref):
    x = x_ref[...]                                              # (block_rows, H)
    y = jnp.dot(x, w_ref[...], preferred_element_type=jnp.float32) + b_ref[...]
    o_ref[...] = jnp.tanh(y).astype(o_ref.dtype)                # tanh -> EUP


# ------------------------------- JAX wrapper ----------------------------------

def imiter_pooler(hidden_states, weight, bias, *, block_rows=512):
    """tanh(hidden_states @ weight.T + bias); `weight` is PyTorch-layout (out, in)."""
    H = hidden_states.shape[-1]
    lead = hidden_states.shape[:-1]

    w_t = weight.T                      # pre-transpose once: kernel does x @ W_t
    b_row = bias.reshape(1, H)

    x2d = hidden_states.reshape(-1, H)  # flatten leading dims -> (rows, H)
    rows = x2d.shape[0]
    br = min(block_rows, rows)          # small inputs: one full-array block
    pad = (-rows) % br
    if pad:
        x2d = jnp.pad(x2d, ((0, pad), (0, 0)))
    rows_p = rows + pad
    grid = (rows_p // br,)

    out = pl.pallas_call(
        _pooler_kernel,
        grid=grid,
        in_specs=[
            pl.BlockSpec((br, H), lambda i: (i, 0)),   # activations: tiled rows
            pl.BlockSpec((H, H), lambda i: (0, 0)),    # weight: resident
            pl.BlockSpec((1, H), lambda i: (0, 0)),    # bias: resident
        ],
        out_specs=pl.BlockSpec((br, H), lambda i: (i, 0)),
        out_shape=jax.ShapeDtypeStruct((rows_p, H), hidden_states.dtype),
        compiler_params=pltpu.CompilerParams(
            dimension_semantics=("parallel",)),        # megacore-friendly on v7x
    )(x2d, w_t, b_row)

    if pad:
        out = out[:rows]
    return out.reshape(*lead, H)


# ----------------------------------- main --------------------------------------

if __name__ == "__main__":
    # Config consistent with the module: hidden_size = 32.
    # The pooler's typical input is the encoder's [CLS] hidden state: (batch, hidden).
    B, H = 2, 32
    key = jax.random.PRNGKey(0)
    kx, kw, kb, kx3 = jax.random.split(key, 4)

    x = jax.random.normal(kx, (B, H), jnp.float32)
    bound = 1.0 / np.sqrt(H)
    w = jax.random.uniform(kw, (H, H), jnp.float32, -bound, bound)  # PyTorch (out, in)
    b = jax.random.uniform(kb, (H,), jnp.float32, -bound, bound)

    out = jax.block_until_ready(imiter_pooler(x, w, b))
    ref = jnp.tanh(x @ w.T + b)
    np.testing.assert_allclose(np.asarray(out), np.asarray(ref), rtol=1e-5, atol=1e-5)

    # The module's forward applies dense+tanh position-wise to whatever shape it is
    # given, so also exercise a 3-D hidden_states (B, S, H).
    S = 25
    x3 = jax.random.normal(kx3, (B, S, H), jnp.float32)
    out3 = jax.block_until_ready(imiter_pooler(x3, w, b))
    ref3 = jnp.tanh(x3 @ w.T + b)
    np.testing.assert_allclose(np.asarray(out3), np.asarray(ref3), rtol=1e-5, atol=1e-5)

    print("KERNEL_OK")
</pallas_src>

<mosaic_0001>
module attributes {stable_mosaic.version = 11 : i64} {
  func.func @_pooler_kernel(%arg0: i32, %arg1: memref<2x32xf32, #tpu.memory_space<vmem>>, %arg2: memref<32x32xf32, #tpu.memory_space<vmem>>, %arg3: memref<1x32xf32, #tpu.memory_space<vmem>>, %arg4: memref<2x32xf32, #tpu.memory_space<vmem>>) attributes {dimension_semantics = [#tpu.dimension_semantics<parallel>], iteration_bounds = array<i64: 1>, scalar_prefetch = 0 : i64, scratch_operands = 0 : i64, tpu.core_type = #tpu.core_type<tc>, window_params = [{transform_indices = @transform_0, window_bounds = array<i64: 2, 32>}, {pipeline_mode = #tpu.pipeline_mode<synchronous>, transform_indices = @transform_1, window_bounds = array<i64: 32, 32>}, {pipeline_mode = #tpu.pipeline_mode<synchronous>, transform_indices = @transform_2, window_bounds = array<i64: 1, 32>}, {transform_indices = @transform_3, window_bounds = array<i64: 2, 32>}]} {
    %c0 = arith.constant 0 : index
    %c0_0 = arith.constant 0 : index
    %0 = vector.load %arg1[%c0, %c0_0] : memref<2x32xf32, #tpu.memory_space<vmem>>, vector<2x32xf32>
    %c0_1 = arith.constant 0 : index
    %c0_2 = arith.constant 0 : index
    %1 = vector.load %arg2[%c0_1, %c0_2] : memref<32x32xf32, #tpu.memory_space<vmem>>, vector<32x32xf32>
    %cst = arith.constant dense<0.000000e+00> : vector<2x32xf32>
    %2 = tpu.matmul %0, %1, %cst {dimension_numbers = #tpu.dot_dimension_numbers<[1], [0], [0], [1], [0, 0, 1, 1], [], []>} : vector<2x32xf32>, vector<32x32xf32>, vector<2x32xf32> -> vector<2x32xf32>
    %c0_3 = arith.constant 0 : index
    %c0_4 = arith.constant 0 : index
    %3 = vector.load %arg3[%c0_3, %c0_4] : memref<1x32xf32, #tpu.memory_space<vmem>>, vector<1x32xf32>
    %4 = vector.broadcast %3 : vector<1x32xf32> to vector<2x32xf32>
    %5 = arith.addf %2, %4 : vector<2x32xf32>
    %6 = math.tanh %5 : vector<2x32xf32>
    %c0_5 = arith.constant 0 : index
    %c0_6 = arith.constant 0 : index
    %7 = vector.load %arg4[%c0_5, %c0_6] : memref<2x32xf32, #tpu.memory_space<vmem>>, vector<2x32xf32>
    tpu.vector_store %arg4[%c0_5, %c0_6], %6 {strides = array<i32>} : memref<2x32xf32, #tpu.memory_space<vmem>>, vector<2x32xf32>,
    return
  }
  func.func @transform_0(%arg0: i32) -> (i32, i32) {
    %c0_i32 = arith.constant 0 : i32
    %c0_i32_0 = arith.constant 0 : i32
    return %arg0, %c0_i32 : i32, i32
  }
  func.func @transform_1(%arg0: i32) -> (i32, i32) {
    %c0_i32 = arith.constant 0 : i32
    %c0_i32_0 = arith.constant 0 : i32
    %c0_i32_1 = arith.constant 0 : i32
    return %c0_i32, %c0_i32_0 : i32, i32
  }
  func.func @transform_2(%arg0: i32) -> (i32, i32) {
    %c0_i32 = arith.constant 0 : i32
    %c0_i32_0 = arith.constant 0 : i32
    %c0_i32_1 = arith.constant 0 : i32
    return %c0_i32, %c0_i32_0 : i32, i32
  }
  func.func @transform_3(%arg0: i32) -> (i32, i32) {
    %c0_i32 = arith.constant 0 : i32
    %c0_i32_0 = arith.constant 0 : i32
    return %arg0, %c0_i32 : i32, i32
  }
}

</mosaic_0001>

<llo_original>
// kernel: tpu_custom_call.1
$region0: #{tpu_custom_call.1}
  #allocation0 [shape = 'u32[]', space=smem, size = 0x4, offset = 0x4, fixed_abs, tag = 'smem constant byte address 0x4 - core index']
  #allocation1 [shape = 'u32[72,128]{1,0:T(1,128)}', space=vmem, size = 0x9000, scoped, tag = 'internal scratch']
  %s0 = inlined_call_operand.hbm [shape: f32[2,32], index: 0, kind: input, shape index: {}]
  %s1 = inlined_call_operand.hbm [shape: f32[32,32], index: 1, kind: input, shape index: {}]
  %s2 = inlined_call_operand.vmem [shape: f32[1,32], index: 2, kind: input, shape index: {}]
  %s3 = inlined_call_operand.hbm [shape: f32[2,32], index: 3, kind: output, shape index: {}]
  %s4 = sld [smem:[#allocation0]]
  $region30: #{tpu_custom_call.1} parent=0
    _
  %s6 = ssub.s32 1, %s4
  %s7 = scalar_select 0, %s6, %s4
  $region1: #{tpu_custom_call.1} parent=0
    #allocation2 [shape = 'u8[1024]{0}', space=vmem, size = 0x400, scoped, tag = 'input window, operand 0, single buffered']
    #allocation3 [shape = 's32[1]{0}', space=sflag, size = 0x4, scoped, tag = 'scoped memory for tpu_custom_call.1']
    #allocation4 [shape = 's32[1]{0}', space=sflag, size = 0x4, scoped, tag = 'scoped memory for tpu_custom_call.1']
    #allocation5 [shape = 'u8[16384]{0}', space=vmem, size = 0x4000, scoped, tag = 'input window, operand 1, single buffered']
    #allocation6 [shape = 's32[1]{0}', space=sflag, size = 0x4, scoped, tag = 'scoped memory for tpu_custom_call.1']
    #allocation7 [shape = 'u8[1024]{0}', space=vmem, size = 0x400, scoped, tag = 'output window, operand 0, single buffered']
    %8 = vsyncpa [#allocation3], 0
    %9 = vsyncpa [#allocation6], 0
    %10 = vsyncpa [#allocation4], 0
    // Predicated region
    $region2: #{tpu_custom_call.1} parent=1 // pred_check
      _
    $region3: #{tpu_custom_call.1} parent=1 // pred_check_branch
      %12 = sbr.rel (0) target = $region5
    $region4: #{tpu_custom_call.1} parent=1 // pred_region
      %14 = vsyncadd [#allocation3], 0
      %s16 = sshll.u32 %s0, 4
      %s17 = int_to_ptr.hbm [resolvable:$true] %s16
      %s18 = sshll.u32 [#allocation2], 4
      %s19 = int_to_ptr.vmem [resolvable:$true] %s18
      %21 = dma.hbm_to_vmem [thread:$0]  %s17, 32, %s19, [#allocation3]
    $region5: #{tpu_custom_call.1} parent=1 // pred_fallthru
      _
    // Predicated region
    $region6: #{tpu_custom_call.1} parent=1 // pred_check
      _
    $region7: #{tpu_custom_call.1} parent=1 // pred_check_branch
      %23 = sbr.rel (0) target = $region9
    $region8: #{tpu_custom_call.1} parent=1 // pred_region
      %25 = vsyncadd [#allocation6], 0
      %s26 = sshll.u32 %s1, 4
      %s27 = int_to_ptr.hbm [resolvable:$true] %s26
      %s28 = sshll.u32 [#allocation5], 4
      %s29 = int_to_ptr.vmem [resolvable:$true] %s28
      %34 = dma.hbm_to_vmem [thread:$0]  %s27, 512, %s29, [#allocation6], 128, 128, 8
    $region9: #{tpu_custom_call.1} parent=1 // pred_fallthru
      _
    // Predicated region
    $region10: #{tpu_custom_call.1} parent=1 // pred_check
      _
    $region11: #{tpu_custom_call.1} parent=1 // pred_check_branch
      %36 = sbr.rel (0) target = $region13
    $region12: #{tpu_custom_call.1} parent=1 // pred_region
      _
    $region13: #{tpu_custom_call.1} parent=1 // pred_fallthru
      _
    // Predicated region
    $region14: #{tpu_custom_call.1} parent=1 // pred_check
      _
    $region15: #{tpu_custom_call.1} parent=1 // pred_check_branch
      %38 = sbr.rel (0) target = $region17
    $region16: #{tpu_custom_call.1} parent=1 // pred_region
      %40 = dma.done [#allocation3], 32
    $region17: #{tpu_custom_call.1} parent=1 // pred_fallthru
      _
    // Predicated region
    $region18: #{tpu_custom_call.1} parent=1 // pred_check
      _
    $region19: #{tpu_custom_call.1} parent=1 // pred_check_branch
      %42 = sbr.rel (0) target = $region21
    $region20: #{tpu_custom_call.1} parent=1 // pred_region
      %44 = dma.done [#allocation6], 512
    $region21: #{tpu_custom_call.1} parent=1 // pred_fallthru
      _
    %v45 = vld [vmem:[#allocation2] sm:$0x3]
    %v46 = vld [vmem:[#allocation5] sm:$0xff]
    %v47 = vld [vmem:[#allocation5 + $0x8] sm:$0xff]
    %v48 = vld [vmem:[#allocation5 + $0x10] sm:$0xff]
    %v49 = vld [vmem:[#allocation5 + $0x18] sm:$0xff]
    %v50 = vld [vmem:[%s2] sm:$0x1]
    %v52 = vperm.slane %v50, 0
    %vm54 = vcmask 261120
    %v56 = vsel %vm54, %v45, 0
    %58 = vmatpush.msra.mxu0 0.0
    %59 = vmatpush.msra.mxu0 0.0
    %60 = vmatpush.msra.mxu0 0.0
    %61 = vmatpush.msra.mxu0 0.0
    %62 = vmatpush.msra.mxu0 0.0
    %63 = vmatpush.msra.mxu0 0.0
    %64 = vmatpush.msra.mxu0 0.0
    %65 = vmatpush.msra.mxu0 0.0
    %66 = vmatpush.msra.mxu0 0.0
    %67 = vmatpush.msra.mxu0 0.0
    %68 = vmatpush.msra.mxu0 0.0
    %69 = vmatpush.msra.mxu0 0.0
    %70 = vmatpush.msra.mxu0 %v49
    %71 = vmatpush.msra.mxu0 %v48
    %72 = vmatpush.msra.mxu0 %v47
    %73 = vmatpush.msra.mxu0 %v46
    %74 = vmatmul.f32.gmra.mxu0 %v56
    %v75 = vpop.f32.mrf.mxu0
    %v76 = vadd.f32 %v52, %v75
    %77 = vdwg.mxu0
    %v78 = vtanh.pop %v76
    %vm79 = vcmask 254976
    %80 = vst.msk [vmem:[#allocation7] sm:$0x3] %vm79, %v78
    // Predicated region
    $region22: #{tpu_custom_call.1} parent=1 // pred_check
      _
    $region23: #{tpu_custom_call.1} parent=1 // pred_check_branch
      %82 = sbr.rel (0) target = $region25
    $region24: #{tpu_custom_call.1} parent=1 // pred_region
      %84 = vsyncadd [#allocation4], 0
      %s86 = sshll.u32 [#allocation7], 4
      %s87 = int_to_ptr.vmem [resolvable:$true] %s86
      %s88 = sshll.u32 %s3, 4
      %s89 = int_to_ptr.hbm [resolvable:$true] %s88
      %91 = dma.vmem_to_hbm [thread:$0]  %s87, 32, %s89, [#allocation4]
    $region25: #{tpu_custom_call.1} parent=1 // pred_fallthru
      _
    // Predicated region
    $region26: #{tpu_custom_call.1} parent=1 // pred_check
      _
    $region27: #{tpu_custom_call.1} parent=1 // pred_check_branch
      %93 = sbr.rel (0) target = $region29
    $region28: #{tpu_custom_call.1} parent=1 // pred_region
      %95 = dma.done [#allocation4], 32
    $region29: #{tpu_custom_call.1} parent=1 // pred_fallthru
      _
    %96 = vsyncpa [#allocation3], 1
    %97 = vsyncpa [#allocation6], 1
    %98 = vsyncpa [#allocation4], 1

</llo_original>
